<compile_context>
chip_gen: v7x
topology: tpu7x:2x2x1
jax: 0.10.0
libtpu: 0.0.40
codegen_flags: <defaults>
</compile_context>

<pallas_src>
from functools import partial

import jax
import jax.numpy as jnp
import numpy as np
from jax import lax
from jax.experimental import pallas as pl
from jax.experimental.pallas import tpu as pltpu

_EPS = 1e-8   # eps placement matches the reference formula below (near-zero-norm rows
              # may differ slightly from ATen's denominator clamp)
_SUB = 256    # rows per in-kernel sub-chunk (multiple of 8 sublanes)


def _round_up(x, m):
    return ((x + m - 1) // m) * m


def _vmem_capacity_bytes():
    # Generation-aware budget (v7x has only 64 MiB VMEM per TensorCore).
    try:
        return int(pltpu.get_tpu_info().vmem_capacity_bytes)
    except Exception:
        return 64 * 1024 * 1024  # conservative fallback (v7x per-TC)


# ---------------------------------------------------------------------------
# Kernel bodies
# ---------------------------------------------------------------------------
def _row_losses(x1, x2, t, margin):
    """Per-row cosine-embedding loss for a [sub, D] f32 chunk; t is [sub, 1] int32."""
    dot = jnp.sum(x1 * x2, axis=1, keepdims=True)           # lane reduce
    n1 = jnp.sum(x1 * x1, axis=1, keepdims=True) + _EPS
    n2 = jnp.sum(x2 * x2, axis=1, keepdims=True) + _EPS
    cos = dot * lax.rsqrt(n1 * n2)                           # EUP rsqrt (free slot)
    pos = 1.0 - cos
    neg = jnp.maximum(cos - margin, 0.0)
    return jnp.where(t == 1, pos, jnp.where(t == -1, neg, 0.0))


def _cosine_loss_reduce_kernel(x1_ref, x2_ref, t_ref, out_ref, *,
                               margin, n_rows, tn, sub):
    """'mean'/'sum' path.  Grid = (2, nbh): axis 0 is a megacore-parallel 2-way batch
    split (each core owns its (sub,1) partial-sum output block), axis 1 iterates the
    per-core batch tiles with the output block resident (accumulator)."""
    c = pl.program_id(0)
    i = pl.program_id(1)
    nbh = pl.num_programs(1)

    @pl.when(i == 0)
    def _():
        out_ref[...] = jnp.zeros_like(out_ref)

    blk = c * nbh + i          # UNCLAMPED global batch-tile index (mask relies on this)
    row0 = blk * tn

    @pl.loop(0, tn // sub)
    def _(j):
        base = pl.multiple_of(j * sub, sub)
        x1 = x1_ref[pl.ds(base, sub), :].astype(jnp.float32)
        x2 = x2_ref[pl.ds(base, sub), :].astype(jnp.float32)
        t = t_ref[pl.ds(base, sub), :]
        per = _row_losses(x1, x2, t, margin)
        rows = row0 + base + lax.broadcasted_iota(jnp.int32, (sub, 1), 0)
        per = jnp.where(rows < n_rows, per, 0.0)   # ragged tail / redundant-tile mask
        out_ref[...] += per                        # resident (sub,1) partial sums


def _cosine_loss_none_kernel(x1_ref, x2_ref, t_ref, out_ref, *,
                             margin, n_rows, tn, sub):
    """'none' path: write per-row losses; one (tn, D) tile per (parallel) grid step."""
    row0 = pl.program_id(0) * tn

    @pl.loop(0, tn // sub)
    def _(j):
        base = pl.multiple_of(j * sub, sub)
        x1 = x1_ref[pl.ds(base, sub), :].astype(jnp.float32)
        x2 = x2_ref[pl.ds(base, sub), :].astype(jnp.float32)
        t = t_ref[pl.ds(base, sub), :]
        per = _row_losses(x1, x2, t, margin)
        rows = row0 + base + lax.broadcasted_iota(jnp.int32, (sub, 1), 0)
        per = jnp.where(rows < n_rows, per, 0.0)
        out_ref[pl.ds(base, sub), :] = per


# ---------------------------------------------------------------------------
# Wrapper
# ---------------------------------------------------------------------------
def cosine_embedding_loss(input1, input2, target, margin=0.0, reduction="mean"):
    """Pallas TPU implementation of F.cosine_embedding_loss.

    input1, input2: [N, D] float arrays (kept in their native dtype).
    target: [N] with values in {+1, -1}.
    """
    input1 = jnp.asarray(input1)
    input2 = jnp.asarray(input2)
    target = jnp.asarray(target)
    assert input1.ndim == 2 and input1.shape == input2.shape
    N, D = input1.shape
    margin = float(margin)

    # Exact integer targets (no float-equality pitfalls); N*4 bytes, negligible.
    t = target.reshape(N, 1).astype(jnp.int32)

    # --- generation-aware tile sizing (native dtype, no padding copies) -------------
    itemsize = max(jnp.dtype(input1.dtype).itemsize, jnp.dtype(input2.dtype).itemsize)
    row_bytes = max(D, 1) * itemsize
    vmem_cap = _vmem_capacity_bytes()
    blk_budget = max(512 * 1024, vmem_cap // 16)       # per input block, per buffer

    rows_fit = max(8, (blk_budget // row_bytes) // 8 * 8)       # rows fitting budget
    rows_need = max(8, _round_up(pl.cdiv(N, 2), 8))             # ~half batch per core
    tn = min(rows_fit, rows_need)
    sub = min(_SUB, tn)
    tn = (tn // sub) * sub                                      # tn multiple of sub
    nb = pl.cdiv(N, tn)                                         # number of batch tiles
    # TODO(synk): rows with D too large to fit an (8, D) block in VMEM would need a
    # D-tiled two-pass variant; not needed for this module's shapes.

    block_bytes = tn * max(D, 1) * itemsize
    vmem_limit = int(min(vmem_cap * 3 // 4, max(6 * blk_budget, 6 * block_bytes)))

    if reduction in ("mean", "sum"):
        nbh = pl.cdiv(nb, 2)                           # batch tiles per core

        def in_map(c, i):
            # Clamp to a valid block so the pipeline DMA never goes out of bounds;
            # the in-kernel row mask (which uses the unclamped index) zeroes the
            # redundant / ragged contribution.
            return (jnp.minimum(c * nbh + i, nb - 1), 0)

        kern = partial(_cosine_loss_reduce_kernel,
                       margin=margin, n_rows=N, tn=tn, sub=sub)
        partials = pl.pallas_call(
            kern,
            out_shape=jax.ShapeDtypeStruct((2 * sub, 1), jnp.float32),
            grid=(2, nbh),
            in_specs=[
                pl.BlockSpec((tn, D), in_map),
                pl.BlockSpec((tn, D), in_map),
                pl.BlockSpec((tn, 1), in_map),
            ],
            out_specs=pl.BlockSpec((sub, 1), lambda c, i: (c, 0)),
            compiler_params=pltpu.CompilerParams(
                dimension_semantics=("parallel", "arbitrary"),
                vmem_limit_bytes=vmem_limit),
        )(input1, input2, t)
        total = jnp.sum(partials)                       # 2*sub floats; trivial in XLA
        if reduction == "mean":
            total = total / N
        return total

    elif reduction == "none":
        kern = partial(_cosine_loss_none_kernel,
                       margin=margin, n_rows=N, tn=tn, sub=sub)
        out = pl.pallas_call(
            kern,
            out_shape=jax.ShapeDtypeStruct((N, 1), jnp.float32),
            grid=(nb,),
            in_specs=[
                pl.BlockSpec((tn, D), lambda i: (i, 0)),
                pl.BlockSpec((tn, D), lambda i: (i, 0)),
                pl.BlockSpec((tn, 1), lambda i: (i, 0)),
            ],
            out_specs=pl.BlockSpec((tn, 1), lambda i: (i, 0)),
            compiler_params=pltpu.CompilerParams(
                dimension_semantics=("parallel",),
                vmem_limit_bytes=vmem_limit),
        )(input1, input2, t)
        return out[:, 0]

    else:
        raise ValueError(f"unsupported reduction: {reduction!r}")


# ---------------------------------------------------------------------------
# Module wrapper (mirrors the PyTorch nn.Module)
# ---------------------------------------------------------------------------
class CosineEmbeddingLoss:
    def __init__(self, margin=0.0, size_average=None, reduce=None, reduction="mean"):
        # size_average / reduce are the deprecated torch args; reduction wins.
        self.margin = margin
        self.reduction = reduction

    def forward(self, input1, input2, target):
        return cosine_embedding_loss(
            input1, input2, target, margin=self.margin, reduction=self.reduction
        )

    __call__ = forward


# ---------------------------------------------------------------------------
if __name__ == "__main__":
    key = jax.random.PRNGKey(0)
    k1, k2, k3, k4, k5, k6 = jax.random.split(key, 6)

    def ref(a, b, t, margin, reduction):
        a = a.astype(jnp.float32)
        b = b.astype(jnp.float32)
        dot = jnp.sum(a * b, axis=1)
        n1 = jnp.sum(a * a, axis=1) + _EPS
        n2 = jnp.sum(b * b, axis=1) + _EPS
        cos = dot / jnp.sqrt(n1 * n2)
        per = jnp.where(t == 1, 1.0 - cos,
                        jnp.where(t == -1, jnp.maximum(cos - margin, 0.0), 0.0))
        if reduction == "mean":
            return jnp.mean(per)
        if reduction == "sum":
            return jnp.sum(per)
        return per

    # 1) Default module config (margin=0.0, reduction='mean'), lane-friendly shape.
    N, D = 8, 128
    x1 = jax.random.normal(k1, (N, D), jnp.float32)
    x2 = jax.random.normal(k2, (N, D), jnp.float32)
    tgt = jnp.where(jax.random.uniform(k3, (N,)) > 0.5, 1, -1).astype(jnp.int32)
    loss = CosineEmbeddingLoss()(x1, x2, tgt)
    jax.block_until_ready(loss)
    np.testing.assert_allclose(float(loss), float(ref(x1, x2, tgt, 0.0, "mean")),
                               rtol=1e-5, atol=1e-5)

    # 2) Ragged shapes (N, D not multiples of 8/128), margin != 0, all reductions.
    N2, D2 = 13, 40
    y1 = jax.random.normal(k4, (N2, D2), jnp.float32)
    y2 = jax.random.normal(k5, (N2, D2), jnp.float32)
    tgt2 = jnp.where(jax.random.uniform(k6, (N2,)) > 0.5, 1, -1).astype(jnp.int32)
    for red in ("mean", "sum", "none"):
        got = CosineEmbeddingLoss(margin=0.2, reduction=red)(y1, y2, tgt2)
        jax.block_until_ready(got)
        want = ref(y1, y2, tgt2, 0.2, red)
        np.testing.assert_allclose(np.asarray(got), np.asarray(want),
                                   rtol=1e-4, atol=1e-5)
    assert CosineEmbeddingLoss(margin=0.2, reduction="none")(y1, y2, tgt2).shape == (N2,)

    # 3) bf16 inputs stay bf16 in HBM (no wrapper upcast); kernel computes in f32.
    z1 = x1.astype(jnp.bfloat16)
    z2 = x2.astype(jnp.bfloat16)
    got_bf16 = CosineEmbeddingLoss()(z1, z2, tgt)
    jax.block_until_ready(got_bf16)
    np.testing.assert_allclose(float(got_bf16), float(ref(z1, z2, tgt, 0.0, "mean")),
                               rtol=2e-3, atol=2e-3)

    print("KERNEL_OK")
</pallas_src>

<mosaic_0001>
module attributes {stable_mosaic.version = 11 : i64} {
  func.func @_cosine_loss_reduce_kernel(%arg0: i32, %arg1: i32, %arg2: memref<8x128xf32, #tpu.memory_space<vmem>>, %arg3: memref<8x128xf32, #tpu.memory_space<vmem>>, %arg4: memref<8x1xi32, #tpu.memory_space<vmem>>, %arg5: memref<8x1xf32, #tpu.memory_space<vmem>>) attributes {dimension_semantics = [#tpu.dimension_semantics<parallel>, #tpu.dimension_semantics<arbitrary>], iteration_bounds = array<i64: 2, 1>, scalar_prefetch = 0 : i64, scratch_operands = 0 : i64, tpu.core_type = #tpu.core_type<tc>, window_params = [{transform_indices = @transform_0, window_bounds = array<i64: 8, 128>}, {transform_indices = @transform_1, window_bounds = array<i64: 8, 128>}, {transform_indices = @transform_2, window_bounds = array<i64: 8, 1>}, {transform_indices = @transform_3, window_bounds = array<i64: 8, 1>}]} {
    %c0_i32 = arith.constant 0 : i32
    %0 = arith.cmpi eq, %arg1, %c0_i32 : i32
    %1 = arith.extui %0 : i1 to i32
    %c0_i32_0 = arith.constant 0 : i32
    %2 = arith.cmpi ne, %1, %c0_i32_0 : i32
    scf.if %2 {
      %cst_23 = arith.constant 0.000000e+00 : f32
      %56 = vector.broadcast %cst_23 : f32 to vector<8x1xf32>
      %c0_24 = arith.constant 0 : index
      %c0_25 = arith.constant 0 : index
      %57 = vector.load %arg5[%c0_24, %c0_25] : memref<8x1xf32, #tpu.memory_space<vmem>>, vector<8x1xf32>
      tpu.vector_store %arg5[%c0_24, %c0_25], %56 {strides = array<i32>} : memref<8x1xf32, #tpu.memory_space<vmem>>, vector<8x1xf32>,
    } else {
    }
    %c1_i32 = arith.constant 1 : i32
    %3 = arith.muli %arg0, %c1_i32 : i32
    %4 = arith.addi %3, %arg1 : i32
    %c8_i32 = arith.constant 8 : i32
    %5 = arith.muli %4, %c8_i32 : i32
    %c0_i32_1 = arith.constant 0 : i32
    %c1_i32_2 = arith.constant 1 : i32
    %6 = arith.muli %c0_i32_1, %c1_i32_2 : i32
    %c0_i32_3 = arith.constant 0 : i32
    %7 = arith.addi %c0_i32_3, %6 : i32
    %c8_i32_4 = arith.constant 8 : i32
    %8 = arith.muli %7, %c8_i32_4 : i32
    %9 = tpu.assume_multiple %8, 8 : i32
    %10 = arith.index_cast %9 : i32 to index
    %c0 = arith.constant 0 : index
    %11 = vector.load %arg2[%10, %c0] : memref<8x128xf32, #tpu.memory_space<vmem>>, vector<8x128xf32>
    %12 = arith.index_cast %9 : i32 to index
    %c0_5 = arith.constant 0 : index
    %13 = vector.load %arg3[%12, %c0_5] : memref<8x128xf32, #tpu.memory_space<vmem>>, vector<8x128xf32>
    %14 = arith.index_cast %9 : i32 to index
    %c0_6 = arith.constant 0 : index
    %15 = vector.load %arg4[%14, %c0_6] : memref<8x1xi32, #tpu.memory_space<vmem>>, vector<8x1xi32>
    %16 = arith.mulf %11, %13 : vector<8x128xf32>
    %cst = arith.constant dense<0.000000e+00> : vector<8xf32>
    %17 = vector.multi_reduction <add>, %16, %cst [1] : vector<8x128xf32> to vector<8xf32>
    %18 = vector.shape_cast %17 : vector<8xf32> to vector<8x1xf32>
    %19 = arith.mulf %11, %11 : vector<8x128xf32>
    %cst_7 = arith.constant dense<0.000000e+00> : vector<8xf32>
    %20 = vector.multi_reduction <add>, %19, %cst_7 [1] : vector<8x128xf32> to vector<8xf32>
    %21 = vector.shape_cast %20 : vector<8xf32> to vector<8x1xf32>
    %cst_8 = arith.constant 9.99999993E-9 : f32
    %22 = vector.broadcast %cst_8 : f32 to vector<8x1xf32>
    %23 = arith.addf %21, %22 : vector<8x1xf32>
    %24 = arith.mulf %13, %13 : vector<8x128xf32>
    %cst_9 = arith.constant dense<0.000000e+00> : vector<8xf32>
    %25 = vector.multi_reduction <add>, %24, %cst_9 [1] : vector<8x128xf32> to vector<8xf32>
    %26 = vector.shape_cast %25 : vector<8xf32> to vector<8x1xf32>
    %cst_10 = arith.constant 9.99999993E-9 : f32
    %27 = vector.broadcast %cst_10 : f32 to vector<8x1xf32>
    %28 = arith.addf %26, %27 : vector<8x1xf32>
    %29 = arith.mulf %23, %28 : vector<8x1xf32>
    %30 = math.rsqrt %29 : vector<8x1xf32>
    %31 = arith.mulf %18, %30 : vector<8x1xf32>
    %cst_11 = arith.constant 1.000000e+00 : f32
    %32 = vector.broadcast %cst_11 : f32 to vector<8x1xf32>
    %33 = arith.subf %32, %31 : vector<8x1xf32>
    %cst_12 = arith.constant 0.000000e+00 : f32
    %34 = vector.broadcast %cst_12 : f32 to vector<8x1xf32>
    %35 = arith.subf %31, %34 : vector<8x1xf32>
    %cst_13 = arith.constant 0.000000e+00 : f32
    %36 = vector.broadcast %cst_13 : f32 to vector<8x1xf32>
    %37 = arith.maximumf %35, %36 : vector<8x1xf32>
    %c1_i32_14 = arith.constant 1 : i32
    %38 = vector.broadcast %c1_i32_14 : i32 to vector<8x1xi32>
    %39 = arith.cmpi eq, %15, %38 : vector<8x1xi32>
    %c-1_i32 = arith.constant -1 : i32
    %40 = vector.broadcast %c-1_i32 : i32 to vector<8x1xi32>
    %41 = arith.cmpi eq, %15, %40 : vector<8x1xi32>
    %cst_15 = arith.constant 0.000000e+00 : f32
    %42 = vector.broadcast %cst_15 : f32 to vector<8x1xf32>
    %43 = arith.select %41, %37, %42 : vector<8x1xi1>, vector<8x1xf32>
    %44 = arith.select %39, %33, %43 : vector<8x1xi1>, vector<8x1xf32>
    %45 = arith.addi %5, %9 : i32
    %46 = tpu.iota {dimensions = array<i32: 0>} : vector<8x1xi32>
    %47 = vector.broadcast %45 : i32 to vector<8x1xi32>
    %48 = arith.addi %47, %46 : vector<8x1xi32>
    %c8_i32_16 = arith.constant 8 : i32
    %49 = vector.broadcast %c8_i32_16 : i32 to vector<8x1xi32>
    %50 = arith.cmpi slt, %48, %49 : vector<8x1xi32>
    %cst_17 = arith.constant 0.000000e+00 : f32
    %51 = vector.broadcast %cst_17 : f32 to vector<8x1xf32>
    %52 = arith.select %50, %44, %51 : vector<8x1xi1>, vector<8x1xf32>
    %c0_18 = arith.constant 0 : index
    %c0_19 = arith.constant 0 : index
    %53 = vector.load %arg5[%c0_18, %c0_19] : memref<8x1xf32, #tpu.memory_space<vmem>>, vector<8x1xf32>
    %54 = arith.addf %53, %52 : vector<8x1xf32>
    %c0_20 = arith.constant 0 : index
    %c0_21 = arith.constant 0 : index
    %55 = vector.load %arg5[%c0_20, %c0_21] : memref<8x1xf32, #tpu.memory_space<vmem>>, vector<8x1xf32>
    tpu.vector_store %arg5[%c0_20, %c0_21], %54 {strides = array<i32>} : memref<8x1xf32, #tpu.memory_space<vmem>>, vector<8x1xf32>,
    %c1_i32_22 = arith.constant 1 : i32
    return
  }
  func.func @transform_0(%arg0: i32, %arg1: i32) -> (i32, i32) {
    %c1_i32 = arith.constant 1 : i32
    %0 = arith.muli %arg0, %c1_i32 : i32
    %1 = arith.addi %0, %arg1 : i32
    %c0_i32 = arith.constant 0 : i32
    %2 = arith.minsi %1, %c0_i32 : i32
    %c0_i32_0 = arith.constant 0 : i32
    %c0_i32_1 = arith.constant 0 : i32
    return %2, %c0_i32_0 : i32, i32
  }
  func.func @transform_1(%arg0: i32, %arg1: i32) -> (i32, i32) {
    %c1_i32 = arith.constant 1 : i32
    %0 = arith.muli %arg0, %c1_i32 : i32
    %1 = arith.addi %0, %arg1 : i32
    %c0_i32 = arith.constant 0 : i32
    %2 = arith.minsi %1, %c0_i32 : i32
    %c0_i32_0 = arith.constant 0 : i32
    %c0_i32_1 = arith.constant 0 : i32
    return %2, %c0_i32_0 : i32, i32
  }
  func.func @transform_2(%arg0: i32, %arg1: i32) -> (i32, i32) {
    %c1_i32 = arith.constant 1 : i32
    %0 = arith.muli %arg0, %c1_i32 : i32
    %1 = arith.addi %0, %arg1 : i32
    %c0_i32 = arith.constant 0 : i32
    %2 = arith.minsi %1, %c0_i32 : i32
    %c0_i32_0 = arith.constant 0 : i32
    %c0_i32_1 = arith.constant 0 : i32
    return %2, %c0_i32_0 : i32, i32
  }
  func.func @transform_3(%arg0: i32, %arg1: i32) -> (i32, i32) {
    %c0_i32 = arith.constant 0 : i32
    %c0_i32_0 = arith.constant 0 : i32
    return %arg0, %c0_i32 : i32, i32
  }
}

</mosaic_0001>

<llo_original>
// kernel: tpu_custom_call.1
$region0: #{tpu_custom_call.1}
  #allocation0 [shape = 'u32[]', space=smem, size = 0x4, offset = 0x4, fixed_abs, tag = 'smem constant byte address 0x4 - core index']
  #allocation1 [shape = 'u32[144,128]{1,0:T(1,128)}', space=vmem, size = 0x12000, scoped, tag = 'internal scratch']
  %s0 = inlined_call_operand.vmem [shape: f32[8,128], index: 0, kind: input, shape index: {}]
  %s1 = inlined_call_operand.hbm [shape: f32[8,128], index: 1, kind: input, shape index: {}]
  %s2 = inlined_call_operand.vmem [shape: s32[8,1], index: 2, kind: input, shape index: {}]
  %s3 = inlined_call_operand.vmem [shape: f32[16,1], index: 3, kind: output, shape index: {}]
  %s4 = sld [smem:[#allocation0]]
  $region53: #{tpu_custom_call.1} parent=0
    _
  %s6 = ssub.s32 1, %s4
  %s7 = scalar_select 0, %s6, %s4
  $region1: #{tpu_custom_call.1} parent=0
    #allocation2 [shape = 'u8[8192]{0}', space=vmem, size = 0x2000, scoped, tag = 'input window, operand 1']
    #allocation3 [shape = 's32[2]{0}', space=sflag, size = 0x8, scoped, tag = 'scoped memory for tpu_custom_call.1']
    %8 = vsyncpa [#allocation3], 0
    %s9 = scalar_lea.sflag [#allocation3], 1
    %10 = vsyncpa %s9, 0
    loop: start=0, step=1, limit=4
    $region2: #{tpu_custom_call.1} parent=1 // loop_pre_header
      _
    $region3: #{tpu_custom_call.1} parent=1 // loop_header
      %s12 = sphi 0, %s16
      %p13 = scmp.ge.s32.totalorder %s12, 4
      %s19 = sphi 0, %s31
      %s20 = sphi 0, %s27
      %s21 = sphi 0, %s19
      %s22 = sphi 0, %s20
      %s23 = sphi 0, %s21
      %s24 = sphi 0, %s22
      %s40 = sphi 0, %s42
      %s43 = sphi 0, %s40
      %s44 = sphi 0, %s43
      %s60 = sphi 0, %s44
      %s72 = sphi 0, %s74
      %s75 = sphi 0, %s72
      %s76 = sphi 0, %s75
      %s92 = sphi 0, %s76
      %s104 = sphi 0, %s106
      %s107 = sphi 0, %s104
      %s108 = sphi 0, %s107
      %s124 = sphi 0, %s108
      %s130 = sphi 0, %s132
      %s133 = sphi 0, %s130
      %s134 = sphi 0, %s133
      %s150 = sphi 0, %s134
    $region4: #{tpu_custom_call.1} parent=1 // loop_header_branch
      %15 = sbr.rel (%p13) target = $region8
    $region5: #{tpu_custom_call.1} parent=1 // loop_body
      %s17 = ssub.s32 %s12, 1
      %s18 = ssub.s32 %s12, 2
      %s25 = sadd.s32 1, %s20
      %p26 = scmp.ge.s32.totalorder %s25, 1
      %s27 = scalar_select %p26, 0, %s25
      %s28 = sadd.s32 1, %s19
      %s29 = scalar_select %p26, %s28, %s19
      %p30 = scmp.ge.s32.totalorder %s29, 2
      %s31 = scalar_select %p30, 0, %s29
      %s32 = sadd.s32 %s19, %s20
      %p33 = scmp.lt.s32.totalorder %s32, 0
      %s34 = scalar_select %p33, %s32, 0
      %s35 = sadd.s32 %s31, %s27
      %p36 = scmp.lt.s32.totalorder %s35, 0
      %s37 = scalar_select %p36, %s35, 0
      %s38 = ssub.s32 %s34, %s37
      %p39 = scmp.eq.s32.totalorder %s38, 0
      %s41 = sadd.s32 %s40, 1
      %s42 = scalar_select %p39, %s40, %s41
      %p45 = pneg %p39
      %p46 = scmp.eq.s32.totalorder %s12, 1
      %p47 = por %p45, %p46
      %p48 = scmp.ne.s32.totalorder %s40, %s43
      %p49 = scmp.eq.s32.totalorder %s12, 0
      %p50 = por %p48, %p49
      %p51 = scmp.ne.s32.totalorder %s40, %s43
      %p52 = scmp.eq.s32.totalorder %s17, 1
      %p53 = por %p51, %p52
      %p54 = scmp.ne.s32.totalorder %s43, %s44
      %p55 = scmp.eq.s32.totalorder %s17, 0
      %p56 = por %p54, %p55
      %p57 = scmp.ne.s32.totalorder %s43, %s44
      %p58 = scmp.eq.s32.totalorder %s18, 1
      %p59 = por %p57, %p58
      %p61 = scmp.ne.s32.totalorder %s44, %s60
      %p62 = scmp.eq.s32.totalorder %s18, 0
      %p63 = por %p61, %p62
      %s64 = sadd.s32 %s19, %s20
      %p65 = scmp.lt.s32.totalorder %s64, 0
      %s66 = scalar_select %p65, %s64, 0
      %s67 = sadd.s32 %s31, %s27
      %p68 = scmp.lt.s32.totalorder %s67, 0
      %s69 = scalar_select %p68, %s67, 0
      %s70 = ssub.s32 %s66, %s69
      %p71 = scmp.eq.s32.totalorder %s70, 0
      %s73 = sadd.s32 %s72, 1
      %s74 = scalar_select %p71, %s72, %s73
      %p77 = pneg %p71
      %p78 = scmp.eq.s32.totalorder %s12, 1
      %p79 = por %p77, %p78
      %p80 = scmp.ne.s32.totalorder %s72, %s75
      %p81 = scmp.eq.s32.totalorder %s12, 0
      %p82 = por %p80, %p81
      %p83 = scmp.ne.s32.totalorder %s72, %s75
      %p84 = scmp.eq.s32.totalorder %s17, 1
      %p85 = por %p83, %p84
      %p86 = scmp.ne.s32.totalorder %s75, %s76
      %p87 = scmp.eq.s32.totalorder %s17, 0
      %p88 = por %p86, %p87
      %p89 = scmp.ne.s32.totalorder %s75, %s76
      %p90 = scmp.eq.s32.totalorder %s18, 1
      %p91 = por %p89, %p90
      %p93 = scmp.ne.s32.totalorder %s76, %s92
      %p94 = scmp.eq.s32.totalorder %s18, 0
      %p95 = por %p93, %p94
      %s96 = sadd.s32 %s19, %s20
      %p97 = scmp.lt.s32.totalorder %s96, 0
      %s98 = scalar_select %p97, %s96, 0
      %s99 = sadd.s32 %s31, %s27
      %p100 = scmp.lt.s32.totalorder %s99, 0
      %s101 = scalar_select %p100, %s99, 0
      %s102 = ssub.s32 %s98, %s101
      %p103 = scmp.eq.s32.totalorder %s102, 0
      %s105 = sadd.s32 %s104, 1
      %s106 = scalar_select %p103, %s104, %s105
      %p109 = pneg %p103
      %p110 = scmp.eq.s32.totalorder %s12, 1
      %p111 = por %p109, %p110
      %p112 = scmp.ne.s32.totalorder %s104, %s107
      %p113 = scmp.eq.s32.totalorder %s12, 0
      %p114 = por %p112, %p113
      %p115 = scmp.ne.s32.totalorder %s104, %s107
      %p116 = scmp.eq.s32.totalorder %s17, 1
      %p117 = por %p115, %p116
      %p118 = scmp.ne.s32.totalorder %s107, %s108
      %p119 = scmp.eq.s32.totalorder %s17, 0
      %p120 = por %p118, %p119
      %p121 = scmp.ne.s32.totalorder %s107, %s108
      %p122 = scmp.eq.s32.totalorder %s18, 1
      %p123 = por %p121, %p122
      %p125 = scmp.ne.s32.totalorder %s108, %s124
      %p126 = scmp.eq.s32.totalorder %s18, 0
      %p127 = por %p125, %p126
      %s128 = ssub.s32 %s19, %s31
      %p129 = scmp.eq.s32.totalorder %s128, 0
      %s131 = sadd.s32 %s130, 1
      %s132 = scalar_select %p129, %s130, %s131
      %p135 = pneg %p129
      %p136 = scmp.eq.s32.totalorder %s12, 1
      %p137 = por %p135, %p136
      %p138 = scmp.ne.s32.totalorder %s130, %s133
      %p139 = scmp.eq.s32.totalorder %s12, 0
      %p140 = por %p138, %p139
      %p141 = scmp.ne.s32.totalorder %s130, %s133
      %p142 = scmp.eq.s32.totalorder %s17, 1
      %p143 = por %p141, %p142
      %p144 = scmp.ne.s32.totalorder %s133, %s134
      %p145 = scmp.eq.s32.totalorder %s17, 0
      %p146 = por %p144, %p145
      %p147 = scmp.ne.s32.totalorder %s133, %s134
      %p148 = scmp.eq.s32.totalorder %s18, 1
      %p149 = por %p147, %p148
      %p151 = scmp.ne.s32.totalorder %s134, %s150
      %p152 = scmp.eq.s32.totalorder %s18, 0
      %p153 = por %p151, %p152
      %p154 = scmp.le.s32.totalorder 1, %s12
      %p155 = scmp.lt.s32.totalorder %s12, 3
      %p156 = pnand %p154, %p155
      %p157 = pneg %p156
      // Predicated region
      $region9: #{tpu_custom_call.1} parent=5 // pred_check
        _
      $region10: #{tpu_custom_call.1} parent=5 // pred_check_branch
        %159 = sbr.rel (%p156) target = $region12
      $region11: #{tpu_custom_call.1} parent=5 // pred_region
        %s160 = ssub.s32 %s12, 1
      $region12: #{tpu_custom_call.1} parent=5 // pred_fallthru
        _
      %p161 = scmp.lt.s32.totalorder %s12, 2
      // Predicated region
      $region13: #{tpu_custom_call.1} parent=5 // pred_check
        %p162 = pneg %p161
      $region14: #{tpu_custom_call.1} parent=5 // pred_check_branch
        %164 = sbr.rel (%p162) target = $region16
      $region15: #{tpu_custom_call.1} parent=5 // pred_region
        // Predicated region
        $region17: #{tpu_custom_call.1} parent=15 // pred_check
          %p165 = pneg %p50
        $region18: #{tpu_custom_call.1} parent=15 // pred_check_branch
          %167 = sbr.rel (%p165) target = $region20
        $region19: #{tpu_custom_call.1} parent=15 // pred_region
          %s168 = sadd.s32 %s19, %s20
          %p169 = scmp.lt.s32.totalorder %s168, 0
          %s170 = scalar_select %p169, %s168, 0
          %p171 = scmp.lt.s32.totalorder %s170, 0
          %s172 = scalar_select %p171, %s170, 0
          %s173 = smul.addr %s172, 8
          %s174 = scalar_lea.vmem %s0, %s173
          %s175 = sadd.s32 %s19, %s20
          %p176 = scmp.lt.s32.totalorder %s175, 0
          %s177 = scalar_select %p176, %s175, 0
        $region20: #{tpu_custom_call.1} parent=15 // pred_fallthru
          _
        // Predicated region
        $region21: #{tpu_custom_call.1} parent=15 // pred_check
          %p178 = pneg %p82
        $region22: #{tpu_custom_call.1} parent=15 // pred_check_branch
          %180 = sbr.rel (%p178) target = $region24
        $region23: #{tpu_custom_call.1} parent=15 // pred_region
          %s181 = sand.u32 %s72, 1
          %s182 = scalar_lea.sflag [#allocation3], %s181
          %s183 = sand.u32 %s72, 1
          %s184 = smul.addr %s183, 8
          %s185 = scalar_lea.vmem [#allocation2], %s184
          %s186 = sadd.s32 %s19, %s20
          %p187 = scmp.lt.s32.totalorder %s186, 0
          %s188 = scalar_select %p187, %s186, 0
          %s190 = ssub.s32 128, 128
          %191 = vsyncadd %s182, %s190
          %s192 = smul.addr %s188, 128
          %s193 = scalar_lea.hbm %s1, %s192
          %s195 = sshll.u32 %s185, 4
          %s196 = int_to_ptr.vmem [resolvable:$true] %s195
          %198 = dma.hbm_to_vmem [thread:$0]  %s193, 128, %s196, %s182
        $region24: #{tpu_custom_call.1} parent=15 // pred_fallthru
          _
        // Predicated region
        $region25: #{tpu_custom_call.1} parent=15 // pred_check
          %p199 = pneg %p114
        $region26: #{tpu_custom_call.1} parent=15 // pred_check_branch
          %201 = sbr.rel (%p199) target = $region28
        $region27: #{tpu_custom_call.1} parent=15 // pred_region
          %s202 = sadd.s32 %s19, %s20
          %p203 = scmp.lt.s32.totalorder %s202, 0
          %s204 = scalar_select %p203, %s202, 0
          %p205 = scmp.lt.s32.totalorder %s204, 0
          %s206 = scalar_select %p205, %s204, 0
          %s207 = smul.addr %s206, 8
          %s208 = scalar_lea.vmem %s2, %s207
          %s209 = sadd.s32 %s19, %s20
          %p210 = scmp.lt.s32.totalorder %s209, 0
          %s211 = scalar_select %p210, %s209, 0
        $region28: #{tpu_custom_call.1} parent=15 // pred_fallthru
          _
      $region16: #{tpu_custom_call.1} parent=5 // pred_fallthru
        _
      %p212 = scmp.le.s32.totalorder 1, %s12
      %p213 = scmp.lt.s32.totalorder %s12, 3
      %p214 = pnand %p212, %p213
      %p215 = pneg %p214
      // Predicated region
      $region29: #{tpu_custom_call.1} parent=5 // pred_check
        _
      $region30: #{tpu_custom_call.1} parent=5 // pred_check_branch
        %217 = sbr.rel (%p214) target = $region32
      $region31: #{tpu_custom_call.1} parent=5 // pred_region
        %s218 = ssub.s32 %s12, 1
        %s219 = sand.u32 %s75, 1
        %s220 = scalar_lea.sflag [#allocation3], %s219
        %s221 = sand.u32 %s75, 1
        %s222 = smul.addr %s221, 8
        %s223 = scalar_lea.vmem [#allocation2], %s222
        // Predicated region
        $region33: #{tpu_custom_call.1} parent=31 // pred_check
          %p224 = pneg %p88
        $region34: #{tpu_custom_call.1} parent=31 // pred_check_branch
          %226 = sbr.rel (%p224) target = $region36
        $region35: #{tpu_custom_call.1} parent=31 // pred_region
          %227 = dma.done %s220, 128
        $region36: #{tpu_custom_call.1} parent=31 // pred_fallthru
          _
        %s228 = sadd.s32 %s21, %s22
        %p229 = scmp.lt.s32.totalorder %s228, 0
        %s230 = scalar_select %p229, %s228, 0
        %p231 = scmp.lt.s32.totalorder %s230, 0
        %s232 = scalar_select %p231, %s230, 0
        %s233 = smul.addr %s232, 8
        %s234 = scalar_lea.vmem %s0, %s233
        %p235 = pneg %p56
        %p236 = pneg %p53
        %s237 = sand.u32 %s75, 1
        %s238 = scalar_lea.sflag [#allocation3], %s237
        %s239 = sand.u32 %s75, 1
        %s240 = smul.addr %s239, 8
        %s241 = scalar_lea.vmem [#allocation2], %s240
        %p242 = pneg %p88
        %p243 = pneg %p85
        %s244 = sadd.s32 %s21, %s22
        %p245 = scmp.lt.s32.totalorder %s244, 0
        %s246 = scalar_select %p245, %s244, 0
        %p247 = scmp.lt.s32.totalorder %s246, 0
        %s248 = scalar_select %p247, %s246, 0
        %s249 = smul.addr %s248, 8
        %s250 = scalar_lea.vmem %s2, %s249
        %p251 = pneg %p120
        %p252 = pneg %p117
        %p253 = pneg %p146
        %p254 = pneg %p143
        %p255 = scmp.lt.s32.totalorder %s21, 1
        %s256 = scalar_select %p255, %s21, 1
        %s257 = smul.addr %s256, 8
        %s258 = scalar_lea.vmem %s3, %s257
        %s259 = sadd.s32 %s21, %s22
        %p260 = scmp.lt.s32.totalorder %s259, 0
        %s261 = scalar_select %p260, %s259, 0
        %p262 = scmp.lt.s32.totalorder %s261, 0
        %s263 = scalar_select %p262, %s261, 0
        %s264 = smul.addr %s263, 8
        %s265 = scalar_lea.vmem %s0, %s264
        %s266 = sadd.s32 %s21, %s22
        %p267 = scmp.lt.s32.totalorder %s266, 0
        %s268 = scalar_select %p267, %s266, 0
        %s269 = sadd.s32 %s21, %s22
        %p270 = scmp.lt.s32.totalorder %s269, 0
        %s271 = scalar_select %p270, %s269, 0
        %s272 = sadd.s32 %s21, %s22
        %p273 = scmp.lt.s32.totalorder %s272, 0
        %s274 = scalar_select %p273, %s272, 0
        %p275 = scmp.lt.s32.totalorder %s274, 0
        %s276 = scalar_select %p275, %s274, 0
        %s277 = smul.addr %s276, 8
        %s278 = scalar_lea.vmem %s2, %s277
        %s279 = sadd.s32 %s21, %s22
        %p280 = scmp.lt.s32.totalorder %s279, 0
        %s281 = scalar_select %p280, %s279, 0
        %p282 = scmp.lt.s32.totalorder %s21, 1
        %s283 = scalar_select %p282, %s21, 1
        %s284 = smul.addr %s283, 8
        %s285 = scalar_lea.vmem %s3, %s284
        %p286 = scmp.eq.s32.totalorder %s22, 0
        // Predicated region
        $region37: #{tpu_custom_call.1} parent=31 // pred_check
          %p287 = pneg %p286
        $region38: #{tpu_custom_call.1} parent=31 // pred_check_branch
          %289 = sbr.rel (%p287) target = $region40
        $region39: #{tpu_custom_call.1} parent=31 // pred_region
          %vm290 = vcmask 7168
          %291 = vst.msk [vmem:[%s285] sm:$0xff] %vm290, 0.0
        $region40: #{tpu_custom_call.1} parent=31 // pred_fallthru
          _
        %s292 = sadd.s32 %s21, %s22
        %s293 = smul.u32 %s292, 8
        %v294 = vld [vmem:[%s265] sm:$0xff]
        %v295 = vld [vmem:[%s223] sm:$0xff]
        %v296 = vld [vmem:[%s278] sm:$0xff]
        %v297 = vmul.f32 %v294, %v295
        %298 = vadd.xlane.f32.xlu0 %v297
        %v299 = vpop.xlane.xlu0 %298
        %v300 = vmul.f32 %v294, %v294
        %301 = vadd.xlane.f32.xlu0 %v300
        %v302 = vpop.xlane.xlu0 %301
        %v303 = vadd.f32 %v302, 1e-08
        %v304 = vmul.f32 %v295, %v295
        %305 = vadd.xlane.f32.xlu0 %v304
        %v306 = vpop.xlane.xlu0 %305
        %v307 = vadd.f32 %v306, 1e-08
        %v308 = vmul.f32 %v303, %v307
        %v309 = vrsqrt.pop %v308
        %v310 = vmul.f32 %v299, %v309
        %v311 = vsub.f32 1.0, %v310
        %v312 = vmax.f32 %v310, 0.0
        %vm313 = vcmp.eq.s32.totalorder %v296, 1
        %vm314 = vcmp.eq.s32.totalorder %v296, 4294967295
        %v315 = vsel %vm314, %v312, 0.0
        %v316 = vsel %vm313, %v311, %v315
        %s317 = sadd.s32 %s293, 0
        %v318 = vlaneseq
        %v319 = vshrl.u32 %v318, 7
        %v320 = vstv %s317
        %v321 = vadd.s32 %v320, %v319
        %vm322 = vcmp.lt.s32.totalorder %v321, 8
        %v323 = vsel %vm322, %v316, 0.0
        %v324 = vld [vmem:[%s285] sm:$0xff]
        %v325 = vadd.f32 %v324, %v323
        %vm326 = vcmask 7168
        %327 = vst.msk [vmem:[%s285] sm:$0xff] %vm326, %v325
        %p328 = scmp.lt.s32.totalorder %s21, 1
        %s329 = scalar_select %p328, %s21, 1
        %s330 = smul.addr %s329, 8
        %s331 = scalar_lea.vmem %s3, %s330
        // Predicated region
        $region41: #{tpu_custom_call.1} parent=31 // pred_check
          %p332 = pneg %p143
        $region42: #{tpu_custom_call.1} parent=31 // pred_check_branch
          %334 = sbr.rel (%p332) target = $region44
        $region43: #{tpu_custom_call.1} parent=31 // pred_region
          _
        $region44: #{tpu_custom_call.1} parent=31 // pred_fallthru
          _
      $region32: #{tpu_custom_call.1} parent=5 // pred_fallthru
        _
      %p335 = scmp.le.s32.totalorder 2, %s12
      // Predicated region
      $region45: #{tpu_custom_call.1} parent=5 // pred_check
        %p336 = pneg %p335
      $region46: #{tpu_custom_call.1} parent=5 // pred_check_branch
        %338 = sbr.rel (%p336) target = $region48
      $region47: #{tpu_custom_call.1} parent=5 // pred_region
        %s339 = ssub.s32 %s12, 2
        // Predicated region
        $region49: #{tpu_custom_call.1} parent=47 // pred_check
          %p340 = pneg %p149
        $region50: #{tpu_custom_call.1} parent=47 // pred_check_branch
          %342 = sbr.rel (%p340) target = $region52
        $region51: #{tpu_custom_call.1} parent=47 // pred_region
          %p343 = scmp.lt.s32.totalorder %s23, 1
          %s344 = scalar_select %p343, %s23, 1
          %s345 = smul.addr %s344, 8
          %s346 = scalar_lea.vmem %s3, %s345
        $region52: #{tpu_custom_call.1} parent=47 // pred_fallthru
          _
      $region48: #{tpu_custom_call.1} parent=5 // pred_fallthru
        _
    $region6: #{tpu_custom_call.1} parent=1 // loop_footer
      %s16 = sadd.s32 1, %s12
    $region7: #{tpu_custom_call.1} parent=1 // loop_footer_branch
      %11 = sbr.rel target = $region3
    $region8: #{tpu_custom_call.1} parent=1 // loop_exit
      _
    %347 = vsyncpa [#allocation3], 1
    %s348 = scalar_lea.sflag [#allocation3], 1
    %349 = vsyncpa %s348, 1

</llo_original>
